<compile_context>
chip_gen: v7x
topology: tpu7x:2x2x1
jax: 0.10.0
libtpu: 0.0.40
codegen_flags: <defaults>
</compile_context>

<pallas_src>
import functools

import jax
import jax.numpy as jnp
from jax import lax
from jax.experimental import pallas as pl
from jax.experimental.pallas import tpu as pltpu


def _fused_gcn_block_kernel(*refs, num_layers, tb, f_pad, relu_set,
                            dropout_set, dropout_rate, use_dropout,
                            compute_dtype):
    """All DenseGCNConv layers for TB batch elements in a single grid step.

    refs layout: [seed (SMEM, only if use_dropout)], x, adj,
                 w0, b0, w1, b1, ..., out_slab
    """
    idx = 0
    seed_ref = None
    if use_dropout:
        seed_ref = refs[idx]
        idx += 1
    x_ref = refs[idx]
    adj_ref = refs[idx + 1]
    idx += 2
    wb_refs = refs[idx: idx + 2 * num_layers]
    out_ref = refs[idx + 2 * num_layers]

    if use_dropout:
        # decorrelate grid steps; bits are drawn in a fixed order within a step
        pltpu.prng_seed(seed_ref[0] + pl.program_id(0))

    n = adj_ref.shape[1]
    ones_col = jnp.ones((n, 1), compute_dtype)

    for b in range(tb):
        adj_c = adj_ref[b]                                   # (N, N) compute dtype
        # Degree with f32 accumulation on the MXU (exact for 0/1 adjacency,
        # correct for N > 256 even though adj is bf16).
        deg = jnp.dot(adj_c, ones_col,
                      preferred_element_type=jnp.float32)    # (N, 1) f32
        dinv = lax.rsqrt(jnp.maximum(deg, 1.0))              # (N, 1) f32
        dinv_row = jnp.transpose(dinv)                       # (1, N) f32

        # Fold D^{-1/2} A D^{-1/2} once per batch element; the f32 math is a
        # transient, only the compute-dtype A_norm stays live for the layers.
        a_norm = (dinv * adj_c * dinv_row).astype(compute_dtype)   # (N, N)

        h = x_ref[b]                                         # (N, F0) f32
        pieces = []
        for i in range(num_layers):
            w = wb_refs[2 * i][...]                          # (Fin, Fout)
            bias = wb_refs[2 * i + 1][...].astype(jnp.float32)   # (1, Fout)

            # Canonical PyG order: A_norm @ (h W) + b, f32 accumulation.
            q = jnp.dot(h.astype(compute_dtype), w.astype(compute_dtype),
                        preferred_element_type=jnp.float32)  # (N, Fout)
            out = jnp.dot(a_norm, q.astype(compute_dtype),
                          preferred_element_type=jnp.float32)
            out = out + bias

            if i in relu_set:
                out = jnp.maximum(out, 0.0)

            if use_dropout and (i in dropout_set):
                # Inverted dropout on the resident tile (no extra HBM trip).
                keep_prob = 1.0 - dropout_rate
                thresh = min(int(keep_prob * 4294967296.0), 4294967295)
                bits = pltpu.bitcast(pltpu.prng_random_bits(out.shape),
                                     jnp.uint32)
                keep = bits < jnp.uint32(thresh)
                out = jnp.where(keep, out * (1.0 / keep_prob), 0.0)

            pieces.append(out)
            h = out   # feeds the next layer without leaving VMEM

        # Pack every layer's embedding into one lane-dense slab and store it
        # with a single full-width write (no masked vst.msk partial stores).
        slab = jnp.concatenate(pieces, axis=-1)
        total = slab.shape[-1]
        if total < f_pad:
            slab = jnp.concatenate(
                [slab, jnp.zeros((n, f_pad - total), slab.dtype)], axis=-1)
        out_ref[b] = slab.astype(out_ref.dtype)


def _pick_vmem_limit_bytes():
    try:
        cap = pltpu.get_tpu_info().vmem_capacity_bytes
    except Exception:
        cap = 64 * 1024 * 1024
    # ~75% of physical VMEM with a floor at the 32 MiB default:
    # v5e/v6e (128 MiB) -> 96 MiB, v7x (64 MiB) -> 48 MiB.
    return max(32 * 1024 * 1024, min((cap * 3) // 4, 100 * 1024 * 1024))


def _choose_tb(batch, n, adj_itemsize, max_unroll=8,
               adj_budget_bytes=4 * 1024 * 1024):
    """Batch elements per grid step: amortize per-step overhead for small
    graphs while keeping >= 2 grid steps (v7x megacore) when B >= 2."""
    per_sample = max(n * n * adj_itemsize, 1)
    max_tb = max(1, min(max_unroll, adj_budget_bytes // per_sample))
    best = 1
    for d in range(1, batch + 1):
        if batch % d != 0 or d > max_tb:
            continue
        if d > 1 and batch // d < 2:
            continue
        best = d
    return best


def dense_gcn_block_forward(x, adj, weights, biases, *, relu_layers_index=(),
                            dropout_layers_index=(), dropout_rate=0.0,
                            training=False, dropout_seed=0,
                            compute_dtype=jnp.bfloat16):
    """x: (B, N, F0), adj: (B, N, N) -> list of per-layer outputs (B, N, Fi)."""
    B, N, F0 = x.shape
    assert adj.shape == (B, N, N)
    num_layers = len(weights)
    fouts = [int(w.shape[1]) for w in weights]
    f_sum = sum(fouts)
    f_pad = ((f_sum + 127) // 128) * 128

    # Compress the adjacency stream before it ever hits the kernel DMA.
    # NOTE: bf16 is exact only for 0/1 (binary) adjacencies; pass
    # compute_dtype=jnp.float32 for weighted / pre-normalized adjacencies.
    adj_c = adj.astype(compute_dtype)

    tb = _choose_tb(B, N, jnp.dtype(compute_dtype).itemsize)
    grid = (B // tb,)

    use_dropout = bool(training and dropout_rate > 0.0
                       and len(dropout_layers_index) > 0)

    kernel = functools.partial(
        _fused_gcn_block_kernel,
        num_layers=num_layers,
        tb=tb,
        f_pad=f_pad,
        relu_set=frozenset(int(i) for i in relu_layers_index),
        dropout_set=frozenset(int(i) for i in dropout_layers_index),
        dropout_rate=float(dropout_rate),
        use_dropout=use_dropout,
        compute_dtype=compute_dtype,
    )

    in_specs = []
    inputs = []
    if use_dropout:
        in_specs.append(pl.BlockSpec(memory_space=pltpu.MemorySpace.SMEM))
        inputs.append(jnp.asarray([dropout_seed], dtype=jnp.int32))

    in_specs += [
        pl.BlockSpec((tb, N, F0), lambda bb: (bb, 0, 0)),
        pl.BlockSpec((tb, N, N), lambda bb: (bb, 0, 0)),
    ]
    inputs += [x, adj_c]
    for w, b in zip(weights, biases):
        in_specs.append(pl.BlockSpec(w.shape, lambda bb: (0, 0)))
        in_specs.append(pl.BlockSpec(b.shape, lambda bb: (0, 0)))
        inputs += [w, b]

    # Single lane-dense output slab; sliced into per-layer embeddings below.
    out_shape = jax.ShapeDtypeStruct((B, N, f_pad), x.dtype)
    out_specs = pl.BlockSpec((tb, N, f_pad), lambda bb: (bb, 0, 0))

    slab = pl.pallas_call(
        kernel,
        out_shape=out_shape,
        grid=grid,
        in_specs=in_specs,
        out_specs=out_specs,
        compiler_params=pltpu.CompilerParams(
            dimension_semantics=("parallel",),
            vmem_limit_bytes=_pick_vmem_limit_bytes(),
        ),
    )(*inputs)

    outs = []
    off = 0
    for fo in fouts:
        outs.append(slab[:, :, off:off + fo])
        off += fo
    return outs


class DenseGCNBlock:
    """JAX/Pallas port of the PyTorch DenseGCNBlock (add_loop=False forward)."""

    def __init__(self, layers_dim, dropout_rate=0.0, relu_layers_index=(),
                 dropout_layers_index=(), key=None,
                 compute_dtype=jnp.bfloat16):
        if key is None:
            key = jax.random.PRNGKey(0)
        self.weights = []
        self.biases = []
        for i in range(len(layers_dim) - 1):
            key, wk = jax.random.split(key)
            fan_in, fan_out = layers_dim[i], layers_dim[i + 1]
            # glorot-uniform-ish init (matches PyG DenseGCNConv); zero bias
            limit = (6.0 / (fan_in + fan_out)) ** 0.5
            w = jax.random.uniform(wk, (fan_in, fan_out), jnp.float32,
                                   minval=-limit, maxval=limit)
            self.weights.append(w)
            self.biases.append(jnp.zeros((1, fan_out), jnp.float32))
        self.dropout_rate = float(dropout_rate)
        self.relu_layers_index = tuple(relu_layers_index)
        self.dropout_layers_index = tuple(dropout_layers_index)
        self.compute_dtype = compute_dtype

    def __call__(self, x, adj, *, training=False, dropout_seed=0):
        outs = dense_gcn_block_forward(
            x, adj, self.weights, self.biases,
            relu_layers_index=self.relu_layers_index,
            dropout_layers_index=self.dropout_layers_index,
            dropout_rate=self.dropout_rate,
            training=training, dropout_seed=dropout_seed,
            compute_dtype=self.compute_dtype)
        embeddings = [x]
        for out in outs:
            # torch.squeeze(output, dim=0): only squeezes if leading dim is 1
            emb = jnp.squeeze(out, axis=0) if out.shape[0] == 1 else out
            embeddings.append(emb)
        return embeddings


if __name__ == "__main__":
    key = jax.random.PRNGKey(0)
    k_x, k_a, k_w = jax.random.split(key, 3)

    B, N = 2, 16
    layers_dim = [8, 32, 16]

    x = jax.random.normal(k_x, (B, N, layers_dim[0]), jnp.float32)
    # random symmetric 0/1 adjacency (no self loops; add_loop=False in forward)
    a = (jax.random.uniform(k_a, (B, N, N)) > 0.5).astype(jnp.float32)
    adj = jnp.maximum(a, jnp.swapaxes(a, -1, -2)) * (
        1.0 - jnp.eye(N, dtype=jnp.float32))

    block = DenseGCNBlock(layers_dim, dropout_rate=0.0,
                          relu_layers_index=[0], dropout_layers_index=[],
                          key=k_w)

    embeddings = block(x, adj)
    for e in embeddings:
        jax.block_until_ready(e)

    assert embeddings[0].shape == (B, N, layers_dim[0])
    assert embeddings[1].shape == (B, N, layers_dim[1])
    assert embeddings[2].shape == (B, N, layers_dim[2])
    assert bool(jnp.all(jnp.isfinite(embeddings[1])))
    assert bool(jnp.all(jnp.isfinite(embeddings[2])))
    print("KERNEL_OK")
</pallas_src>

<mosaic_0001>
module attributes {stable_mosaic.version = 11 : i64} {
  func.func @_fused_gcn_block_kernel(%arg0: i32, %arg1: memref<1x16x8xf32, #tpu.memory_space<vmem>>, %arg2: memref<1x16x16xbf16, #tpu.memory_space<vmem>>, %arg3: memref<8x32xf32, #tpu.memory_space<vmem>>, %arg4: memref<1x32xf32, #tpu.memory_space<vmem>>, %arg5: memref<32x16xf32, #tpu.memory_space<vmem>>, %arg6: memref<1x16xf32, #tpu.memory_space<vmem>>, %arg7: memref<1x16x128xf32, #tpu.memory_space<vmem>>) attributes {dimension_semantics = [#tpu.dimension_semantics<parallel>], iteration_bounds = array<i64: 2>, scalar_prefetch = 0 : i64, scratch_operands = 0 : i64, tpu.core_type = #tpu.core_type<tc>, window_params = [{transform_indices = @transform_0, window_bounds = array<i64: 1, 16, 8>}, {transform_indices = @transform_1, window_bounds = array<i64: 1, 16, 16>}, {pipeline_mode = #tpu.pipeline_mode<synchronous>, transform_indices = @transform_2, window_bounds = array<i64: 8, 32>}, {pipeline_mode = #tpu.pipeline_mode<synchronous>, transform_indices = @transform_3, window_bounds = array<i64: 1, 32>}, {pipeline_mode = #tpu.pipeline_mode<synchronous>, transform_indices = @transform_4, window_bounds = array<i64: 32, 16>}, {pipeline_mode = #tpu.pipeline_mode<synchronous>, transform_indices = @transform_5, window_bounds = array<i64: 1, 16>}, {transform_indices = @transform_6, window_bounds = array<i64: 1, 16, 128>}]} {
    %cst = arith.constant 1.000000e+00 : bf16
    %0 = vector.broadcast %cst : bf16 to vector<16x1xbf16>
    %c0 = arith.constant 0 : index
    %c0_0 = arith.constant 0 : index
    %c0_1 = arith.constant 0 : index
    %1 = vector.load %arg2[%c0, %c0_0, %c0_1] : memref<1x16x16xbf16, #tpu.memory_space<vmem>>, vector<1x16x16xbf16>
    %2 = vector.shape_cast %1 : vector<1x16x16xbf16> to vector<16x16xbf16>
    %cst_2 = arith.constant dense<0.000000e+00> : vector<16x1xf32>
    %3 = tpu.matmul %2, %0, %cst_2 {dimension_numbers = #tpu.dot_dimension_numbers<[1], [0], [0], [1], [0, 0, 1, 1], [], []>} : vector<16x16xbf16>, vector<16x1xbf16>, vector<16x1xf32> -> vector<16x1xf32>
    %cst_3 = arith.constant 1.000000e+00 : f32
    %4 = vector.broadcast %cst_3 : f32 to vector<16x1xf32>
    %5 = arith.maximumf %3, %4 : vector<16x1xf32>
    %6 = math.rsqrt %5 : vector<16x1xf32>
    %7 = tpu.transpose %6, [1, 0] : vector<16x1xf32> -> vector<1x16xf32>
    %8 = arith.extf %2 : vector<16x16xbf16> to vector<16x16xf32>
    %9 = vector.broadcast %6 : vector<16x1xf32> to vector<16x16xf32>
    %10 = arith.mulf %9, %8 : vector<16x16xf32>
    %11 = vector.broadcast %7 : vector<1x16xf32> to vector<16x16xf32>
    %12 = arith.mulf %10, %11 : vector<16x16xf32>
    %13 = arith.truncf %12 : vector<16x16xf32> to vector<16x16xbf16>
    %c0_4 = arith.constant 0 : index
    %c0_5 = arith.constant 0 : index
    %c0_6 = arith.constant 0 : index
    %14 = vector.load %arg1[%c0_4, %c0_5, %c0_6] : memref<1x16x8xf32, #tpu.memory_space<vmem>>, vector<1x16x8xf32>
    %15 = vector.shape_cast %14 : vector<1x16x8xf32> to vector<16x8xf32>
    %c0_7 = arith.constant 0 : index
    %c0_8 = arith.constant 0 : index
    %16 = vector.load %arg3[%c0_7, %c0_8] : memref<8x32xf32, #tpu.memory_space<vmem>>, vector<8x32xf32>
    %c0_9 = arith.constant 0 : index
    %c0_10 = arith.constant 0 : index
    %17 = vector.load %arg4[%c0_9, %c0_10] : memref<1x32xf32, #tpu.memory_space<vmem>>, vector<1x32xf32>
    %18 = arith.truncf %15 : vector<16x8xf32> to vector<16x8xbf16>
    %19 = arith.truncf %16 : vector<8x32xf32> to vector<8x32xbf16>
    %cst_11 = arith.constant dense<0.000000e+00> : vector<16x32xf32>
    %20 = tpu.matmul %18, %19, %cst_11 {dimension_numbers = #tpu.dot_dimension_numbers<[1], [0], [0], [1], [0, 0, 1, 1], [], []>} : vector<16x8xbf16>, vector<8x32xbf16>, vector<16x32xf32> -> vector<16x32xf32>
    %21 = arith.truncf %20 : vector<16x32xf32> to vector<16x32xbf16>
    %cst_12 = arith.constant dense<0.000000e+00> : vector<16x32xf32>
    %22 = tpu.matmul %13, %21, %cst_12 {dimension_numbers = #tpu.dot_dimension_numbers<[1], [0], [0], [1], [0, 0, 1, 1], [], []>} : vector<16x16xbf16>, vector<16x32xbf16>, vector<16x32xf32> -> vector<16x32xf32>
    %23 = vector.broadcast %17 : vector<1x32xf32> to vector<16x32xf32>
    %24 = arith.addf %22, %23 : vector<16x32xf32>
    %cst_13 = arith.constant 0.000000e+00 : f32
    %25 = vector.broadcast %cst_13 : f32 to vector<16x32xf32>
    %26 = arith.maximumf %24, %25 : vector<16x32xf32>
    %c0_14 = arith.constant 0 : index
    %c0_15 = arith.constant 0 : index
    %27 = vector.load %arg5[%c0_14, %c0_15] : memref<32x16xf32, #tpu.memory_space<vmem>>, vector<32x16xf32>
    %c0_16 = arith.constant 0 : index
    %c0_17 = arith.constant 0 : index
    %28 = vector.load %arg6[%c0_16, %c0_17] : memref<1x16xf32, #tpu.memory_space<vmem>>, vector<1x16xf32>
    %29 = arith.truncf %26 : vector<16x32xf32> to vector<16x32xbf16>
    %30 = arith.truncf %27 : vector<32x16xf32> to vector<32x16xbf16>
    %cst_18 = arith.constant dense<0.000000e+00> : vector<16x16xf32>
    %31 = tpu.matmul %29, %30, %cst_18 {dimension_numbers = #tpu.dot_dimension_numbers<[1], [0], [0], [1], [0, 0, 1, 1], [], []>} : vector<16x32xbf16>, vector<32x16xbf16>, vector<16x16xf32> -> vector<16x16xf32>
    %32 = arith.truncf %31 : vector<16x16xf32> to vector<16x16xbf16>
    %cst_19 = arith.constant dense<0.000000e+00> : vector<16x16xf32>
    %33 = tpu.matmul %13, %32, %cst_19 {dimension_numbers = #tpu.dot_dimension_numbers<[1], [0], [0], [1], [0, 0, 1, 1], [], []>} : vector<16x16xbf16>, vector<16x16xbf16>, vector<16x16xf32> -> vector<16x16xf32>
    %34 = vector.broadcast %28 : vector<1x16xf32> to vector<16x16xf32>
    %35 = arith.addf %33, %34 : vector<16x16xf32>
    %36 = tpu.concatenate %26, %35 in 1 : vector<16x32xf32>, vector<16x16xf32> -> vector<16x48xf32>
    %cst_20 = arith.constant 0.000000e+00 : f32
    %37 = vector.broadcast %cst_20 : f32 to vector<16x80xf32>
    %38 = tpu.concatenate %36, %37 in 1 : vector<16x48xf32>, vector<16x80xf32> -> vector<16x128xf32>
    %c0_21 = arith.constant 0 : index
    %c0_22 = arith.constant 0 : index
    %c0_23 = arith.constant 0 : index
    %39 = vector.load %arg7[%c0_21, %c0_22, %c0_23] : memref<1x16x128xf32, #tpu.memory_space<vmem>>, vector<1x16x128xf32>
    %40 = vector.shape_cast %39 : vector<1x16x128xf32> to vector<16x128xf32>
    %41 = vector.shape_cast %38 : vector<16x128xf32> to vector<1x16x128xf32>
    tpu.vector_store %arg7[%c0_21, %c0_22, %c0_23], %41 {strides = array<i32>} : memref<1x16x128xf32, #tpu.memory_space<vmem>>, vector<1x16x128xf32>,
    return
  }
  func.func @transform_0(%arg0: i32) -> (i32, i32, i32) {
    %c0_i32 = arith.constant 0 : i32
    %c0_i32_0 = arith.constant 0 : i32
    %c0_i32_1 = arith.constant 0 : i32
    return %arg0, %c0_i32, %c0_i32_0 : i32, i32, i32
  }
  func.func @transform_1(%arg0: i32) -> (i32, i32, i32) {
    %c0_i32 = arith.constant 0 : i32
    %c0_i32_0 = arith.constant 0 : i32
    %c0_i32_1 = arith.constant 0 : i32
    return %arg0, %c0_i32, %c0_i32_0 : i32, i32, i32
  }
  func.func @transform_2(%arg0: i32) -> (i32, i32) {
    %c0_i32 = arith.constant 0 : i32
    %c0_i32_0 = arith.constant 0 : i32
    %c0_i32_1 = arith.constant 0 : i32
    return %c0_i32, %c0_i32_0 : i32, i32
  }
  func.func @transform_3(%arg0: i32) -> (i32, i32) {
    %c0_i32 = arith.constant 0 : i32
    %c0_i32_0 = arith.constant 0 : i32
    %c0_i32_1 = arith.constant 0 : i32
    return %c0_i32, %c0_i32_0 : i32, i32
  }
  func.func @transform_4(%arg0: i32) -> (i32, i32) {
    %c0_i32 = arith.constant 0 : i32
    %c0_i32_0 = arith.constant 0 : i32
    %c0_i32_1 = arith.constant 0 : i32
    return %c0_i32, %c0_i32_0 : i32, i32
  }
  func.func @transform_5(%arg0: i32) -> (i32, i32) {
    %c0_i32 = arith.constant 0 : i32
    %c0_i32_0 = arith.constant 0 : i32
    %c0_i32_1 = arith.constant 0 : i32
    return %c0_i32, %c0_i32_0 : i32, i32
  }
  func.func @transform_6(%arg0: i32) -> (i32, i32, i32) {
    %c0_i32 = arith.constant 0 : i32
    %c0_i32_0 = arith.constant 0 : i32
    %c0_i32_1 = arith.constant 0 : i32
    return %arg0, %c0_i32, %c0_i32_0 : i32, i32, i32
  }
}

</mosaic_0001>

<llo_original>
// kernel: tpu_custom_call.1
$region0: #{tpu_custom_call.1}
  #allocation0 [shape = 'u32[]', space=smem, size = 0x4, offset = 0x4, fixed_abs, tag = 'smem constant byte address 0x4 - core index']
  #allocation1 [shape = 'u32[144,128]{1,0:T(1,128)}', space=vmem, size = 0x12000, scoped, tag = 'internal scratch']
  %s0 = inlined_call_operand.vmem [shape: f32[2,16,8], index: 0, kind: input, shape index: {}]
  %s1 = inlined_call_operand.vmem [shape: bf16[2,16,16], index: 1, kind: input, shape index: {}]
  %s2 = inlined_call_operand.vmem [shape: f32[8,32], index: 2, kind: input, shape index: {}]
  %s3 = inlined_call_operand.vmem [shape: f32[1,32], index: 3, kind: input, shape index: {}]
  %s4 = inlined_call_operand.vmem [shape: f32[32,16], index: 4, kind: input, shape index: {}]
  %s5 = inlined_call_operand.vmem [shape: f32[1,16], index: 5, kind: input, shape index: {}]
  %s6 = inlined_call_operand.hbm [shape: f32[2,16,128], index: 6, kind: output, shape index: {}]
  %s7 = sld [smem:[#allocation0]]
  $region57: #{tpu_custom_call.1} parent=0
    _
  %s9 = ssub.s32 1, %s7
  %s10 = scalar_select 0, %s9, %s7
  $region1: #{tpu_custom_call.1} parent=0
    #allocation2 [shape = 'u8[16384]{0}', space=vmem, size = 0x4000, scoped, tag = 'output window, operand 0']
    #allocation3 [shape = 's32[2]{0}', space=sflag, size = 0x8, scoped, tag = 'scoped memory for tpu_custom_call.1']
    %11 = vsyncpa [#allocation3], 0
    %s12 = scalar_lea.sflag [#allocation3], 1
    %13 = vsyncpa %s12, 0
    loop: start=0, step=1, limit=4
    $region2: #{tpu_custom_call.1} parent=1 // loop_pre_header
      _
    $region3: #{tpu_custom_call.1} parent=1 // loop_header
      %s15 = sphi 0, %s19
      %p16 = scmp.ge.s32.totalorder %s15, 4
      %s25 = sphi 0, %s27
      %s28 = sphi 0, %s25
      %s29 = sphi 0, %s28
      %s45 = sphi 0, %s29
      %s51 = sphi 0, %s53
      %s54 = sphi 0, %s51
      %s55 = sphi 0, %s54
      %s71 = sphi 0, %s55
      %s75 = sphi 0, %s75
      %s77 = sphi 0, %s75
      %s78 = sphi 0, %s77
      %s92 = sphi 0, %s78
      %s96 = sphi 0, %s96
      %s98 = sphi 0, %s96
      %s99 = sphi 0, %s98
      %s113 = sphi 0, %s99
      %s117 = sphi 0, %s117
      %s119 = sphi 0, %s117
      %s120 = sphi 0, %s119
      %s134 = sphi 0, %s120
      %s138 = sphi 0, %s138
      %s140 = sphi 0, %s138
      %s141 = sphi 0, %s140
      %s155 = sphi 0, %s141
      %s161 = sphi 0, %s163
      %s164 = sphi 0, %s161
      %s165 = sphi 0, %s164
      %s181 = sphi 0, %s165
    $region4: #{tpu_custom_call.1} parent=1 // loop_header_branch
      %18 = sbr.rel (%p16) target = $region8
    $region5: #{tpu_custom_call.1} parent=1 // loop_body
      %s20 = ssub.s32 %s15, 1
      %s21 = ssub.s32 %s15, 2
      %s22 = sadd.s32 %s15, 1
      %s23 = ssub.s32 %s15, %s22
      %p24 = scmp.eq.s32.totalorder %s23, 0
      %s26 = sadd.s32 %s25, 1
      %s27 = scalar_select %p24, %s25, %s26
      %p30 = pneg %p24
      %p31 = scmp.eq.s32.totalorder %s15, 1
      %p32 = por %p30, %p31
      %p33 = scmp.ne.s32.totalorder %s25, %s28
      %p34 = scmp.eq.s32.totalorder %s15, 0
      %p35 = por %p33, %p34
      %p36 = scmp.ne.s32.totalorder %s25, %s28
      %p37 = scmp.eq.s32.totalorder %s20, 1
      %p38 = por %p36, %p37
      %p39 = scmp.ne.s32.totalorder %s28, %s29
      %p40 = scmp.eq.s32.totalorder %s20, 0
      %p41 = por %p39, %p40
      %p42 = scmp.ne.s32.totalorder %s28, %s29
      %p43 = scmp.eq.s32.totalorder %s21, 1
      %p44 = por %p42, %p43
      %p46 = scmp.ne.s32.totalorder %s29, %s45
      %p47 = scmp.eq.s32.totalorder %s21, 0
      %p48 = por %p46, %p47
      %s49 = ssub.s32 %s15, %s22
      %p50 = scmp.eq.s32.totalorder %s49, 0
      %s52 = sadd.s32 %s51, 1
      %s53 = scalar_select %p50, %s51, %s52
      %p56 = pneg %p50
      %p57 = scmp.eq.s32.totalorder %s15, 1
      %p58 = por %p56, %p57
      %p59 = scmp.ne.s32.totalorder %s51, %s54
      %p60 = scmp.eq.s32.totalorder %s15, 0
      %p61 = por %p59, %p60
      %p62 = scmp.ne.s32.totalorder %s51, %s54
      %p63 = scmp.eq.s32.totalorder %s20, 1
      %p64 = por %p62, %p63
      %p65 = scmp.ne.s32.totalorder %s54, %s55
      %p66 = scmp.eq.s32.totalorder %s20, 0
      %p67 = por %p65, %p66
      %p68 = scmp.ne.s32.totalorder %s54, %s55
      %p69 = scmp.eq.s32.totalorder %s21, 1
      %p70 = por %p68, %p69
      %p72 = scmp.ne.s32.totalorder %s55, %s71
      %p73 = scmp.eq.s32.totalorder %s21, 0
      %p74 = por %p72, %p73
      %s76 = sadd.s32 %s75, 1
      %p79 = scmp.eq.s32.totalorder %s15, 1
      %p80 = scmp.ne.s32.totalorder %s75, %s77
      %p81 = scmp.eq.s32.totalorder %s15, 0
      %p82 = por %p80, %p81
      %p83 = scmp.ne.s32.totalorder %s75, %s77
      %p84 = scmp.eq.s32.totalorder %s20, 1
      %p85 = por %p83, %p84
      %p86 = scmp.ne.s32.totalorder %s77, %s78
      %p87 = scmp.eq.s32.totalorder %s20, 0
      %p88 = por %p86, %p87
      %p89 = scmp.ne.s32.totalorder %s77, %s78
      %p90 = scmp.eq.s32.totalorder %s21, 1
      %p91 = por %p89, %p90
      %p93 = scmp.ne.s32.totalorder %s78, %s92
      %p94 = scmp.eq.s32.totalorder %s21, 0
      %p95 = por %p93, %p94
      %s97 = sadd.s32 %s96, 1
      %p100 = scmp.eq.s32.totalorder %s15, 1
      %p101 = scmp.ne.s32.totalorder %s96, %s98
      %p102 = scmp.eq.s32.totalorder %s15, 0
      %p103 = por %p101, %p102
      %p104 = scmp.ne.s32.totalorder %s96, %s98
      %p105 = scmp.eq.s32.totalorder %s20, 1
      %p106 = por %p104, %p105
      %p107 = scmp.ne.s32.totalorder %s98, %s99
      %p108 = scmp.eq.s32.totalorder %s20, 0
      %p109 = por %p107, %p108
      %p110 = scmp.ne.s32.totalorder %s98, %s99
      %p111 = scmp.eq.s32.totalorder %s21, 1
      %p112 = por %p110, %p111
      %p114 = scmp.ne.s32.totalorder %s99, %s113
      %p115 = scmp.eq.s32.totalorder %s21, 0
      %p116 = por %p114, %p115
      %s118 = sadd.s32 %s117, 1
      %p121 = scmp.eq.s32.totalorder %s15, 1
      %p122 = scmp.ne.s32.totalorder %s117, %s119
      %p123 = scmp.eq.s32.totalorder %s15, 0
      %p124 = por %p122, %p123
      %p125 = scmp.ne.s32.totalorder %s117, %s119
      %p126 = scmp.eq.s32.totalorder %s20, 1
      %p127 = por %p125, %p126
      %p128 = scmp.ne.s32.totalorder %s119, %s120
      %p129 = scmp.eq.s32.totalorder %s20, 0
      %p130 = por %p128, %p129
      %p131 = scmp.ne.s32.totalorder %s119, %s120
      %p132 = scmp.eq.s32.totalorder %s21, 1
      %p133 = por %p131, %p132
      %p135 = scmp.ne.s32.totalorder %s120, %s134
      %p136 = scmp.eq.s32.totalorder %s21, 0
      %p137 = por %p135, %p136
      %s139 = sadd.s32 %s138, 1
      %p142 = scmp.eq.s32.totalorder %s15, 1
      %p143 = scmp.ne.s32.totalorder %s138, %s140
      %p144 = scmp.eq.s32.totalorder %s15, 0
      %p145 = por %p143, %p144
      %p146 = scmp.ne.s32.totalorder %s138, %s140
      %p147 = scmp.eq.s32.totalorder %s20, 1
      %p148 = por %p146, %p147
      %p149 = scmp.ne.s32.totalorder %s140, %s141
      %p150 = scmp.eq.s32.totalorder %s20, 0
      %p151 = por %p149, %p150
      %p152 = scmp.ne.s32.totalorder %s140, %s141
      %p153 = scmp.eq.s32.totalorder %s21, 1
      %p154 = por %p152, %p153
      %p156 = scmp.ne.s32.totalorder %s141, %s155
      %p157 = scmp.eq.s32.totalorder %s21, 0
      %p158 = por %p156, %p157
      %s159 = ssub.s32 %s15, %s22
      %p160 = scmp.eq.s32.totalorder %s159, 0
      %s162 = sadd.s32 %s161, 1
      %s163 = scalar_select %p160, %s161, %s162
      %p166 = pneg %p160
      %p167 = scmp.eq.s32.totalorder %s15, 1
      %p168 = por %p166, %p167
      %p169 = scmp.ne.s32.totalorder %s161, %s164
      %p170 = scmp.eq.s32.totalorder %s15, 0
      %p171 = por %p169, %p170
      %p172 = scmp.ne.s32.totalorder %s161, %s164
      %p173 = scmp.eq.s32.totalorder %s20, 1
      %p174 = por %p172, %p173
      %p175 = scmp.ne.s32.totalorder %s164, %s165
      %p176 = scmp.eq.s32.totalorder %s20, 0
      %p177 = por %p175, %p176
      %p178 = scmp.ne.s32.totalorder %s164, %s165
      %p179 = scmp.eq.s32.totalorder %s21, 1
      %p180 = por %p178, %p179
      %p182 = scmp.ne.s32.totalorder %s165, %s181
      %p183 = scmp.eq.s32.totalorder %s21, 0
      %p184 = por %p182, %p183
      %p185 = scmp.le.s32.totalorder 1, %s15
      %p186 = scmp.lt.s32.totalorder %s15, 3
      %p187 = pnand %p185, %p186
      %p188 = pneg %p187
      // Predicated region
      $region9: #{tpu_custom_call.1} parent=5 // pred_check
        _
      $region10: #{tpu_custom_call.1} parent=5 // pred_check_branch
        %190 = sbr.rel (%p187) target = $region12
      $region11: #{tpu_custom_call.1} parent=5 // pred_region
        %s191 = ssub.s32 %s15, 1
        // Predicated region
        $region13: #{tpu_custom_call.1} parent=11 // pred_check
          %p192 = pneg %p88
        $region14: #{tpu_custom_call.1} parent=11 // pred_check_branch
          %194 = sbr.rel (%p192) target = $region16
        $region15: #{tpu_custom_call.1} parent=11 // pred_region
          _
        $region16: #{tpu_custom_call.1} parent=11 // pred_fallthru
          _
        // Predicated region
        $region17: #{tpu_custom_call.1} parent=11 // pred_check
          %p195 = pneg %p109
        $region18: #{tpu_custom_call.1} parent=11 // pred_check_branch
          %197 = sbr.rel (%p195) target = $region20
        $region19: #{tpu_custom_call.1} parent=11 // pred_region
          _
        $region20: #{tpu_custom_call.1} parent=11 // pred_fallthru
          _
        // Predicated region
        $region21: #{tpu_custom_call.1} parent=11 // pred_check
          %p198 = pneg %p130
        $region22: #{tpu_custom_call.1} parent=11 // pred_check_branch
          %200 = sbr.rel (%p198) target = $region24
        $region23: #{tpu_custom_call.1} parent=11 // pred_region
          _
        $region24: #{tpu_custom_call.1} parent=11 // pred_fallthru
          _
        // Predicated region
        $region25: #{tpu_custom_call.1} parent=11 // pred_check
          %p201 = pneg %p151
        $region26: #{tpu_custom_call.1} parent=11 // pred_check_branch
          %203 = sbr.rel (%p201) target = $region28
        $region27: #{tpu_custom_call.1} parent=11 // pred_region
          _
        $region28: #{tpu_custom_call.1} parent=11 // pred_fallthru
          _
      $region12: #{tpu_custom_call.1} parent=5 // pred_fallthru
        _
      %p204 = scmp.lt.s32.totalorder %s15, 2
      // Predicated region
      $region29: #{tpu_custom_call.1} parent=5 // pred_check
        %p205 = pneg %p204
      $region30: #{tpu_custom_call.1} parent=5 // pred_check_branch
        %207 = sbr.rel (%p205) target = $region32
      $region31: #{tpu_custom_call.1} parent=5 // pred_region
        // Predicated region
        $region33: #{tpu_custom_call.1} parent=31 // pred_check
          %p208 = pneg %p35
        $region34: #{tpu_custom_call.1} parent=31 // pred_check_branch
          %210 = sbr.rel (%p208) target = $region36
        $region35: #{tpu_custom_call.1} parent=31 // pred_region
          %p211 = scmp.lt.s32.totalorder %s15, 1
          %s212 = scalar_select %p211, %s15, 1
          %s213 = smul.addr %s212, 2
          %s214 = smul.addr %s213, 8
          %s215 = scalar_lea.vmem %s0, %s214
        $region36: #{tpu_custom_call.1} parent=31 // pred_fallthru
          _
        // Predicated region
        $region37: #{tpu_custom_call.1} parent=31 // pred_check
          %p216 = pneg %p61
        $region38: #{tpu_custom_call.1} parent=31 // pred_check_branch
          %218 = sbr.rel (%p216) target = $region40
        $region39: #{tpu_custom_call.1} parent=31 // pred_region
          %p219 = scmp.lt.s32.totalorder %s15, 1
          %s220 = scalar_select %p219, %s15, 1
          %s221 = smul.addr %s220, 2
          %s222 = smul.addr %s221, 4
          %s223 = scalar_lea.vmem %s1, %s222
        $region40: #{tpu_custom_call.1} parent=31 // pred_fallthru
          _
      $region32: #{tpu_custom_call.1} parent=5 // pred_fallthru
        _
      %p224 = scmp.le.s32.totalorder 1, %s15
      %p225 = scmp.lt.s32.totalorder %s15, 3
      %p226 = pnand %p224, %p225
      %p227 = pneg %p226
      // Predicated region
      $region41: #{tpu_custom_call.1} parent=5 // pred_check
        _
      $region42: #{tpu_custom_call.1} parent=5 // pred_check_branch
        %229 = sbr.rel (%p226) target = $region44
      $region43: #{tpu_custom_call.1} parent=5 // pred_region
        %s230 = ssub.s32 %s15, 1
        %p231 = scmp.lt.s32.totalorder %s20, 1
        %s232 = scalar_select %p231, %s20, 1
        %s233 = smul.addr %s232, 2
        %s234 = smul.addr %s233, 8
        %s235 = scalar_lea.vmem %s0, %s234
        %p236 = pneg %p41
        %p237 = pneg %p38
        %p238 = scmp.lt.s32.totalorder %s20, 1
        %s239 = scalar_select %p238, %s20, 1
        %s240 = smul.addr %s239, 2
        %s241 = smul.addr %s240, 4
        %s242 = scalar_lea.vmem %s1, %s241
        %p243 = pneg %p67
        %p244 = pneg %p64
        %p245 = pneg %p88
        %p246 = pneg %p85
        %p247 = pneg %p109
        %p248 = pneg %p106
        %p249 = pneg %p130
        %p250 = pneg %p127
        %p251 = pneg %p151
        %p252 = pneg %p148
        %p253 = pneg %p177
        %p254 = pneg %p174
        %s255 = sand.u32 %s164, 1
        %s256 = scalar_lea.sflag [#allocation3], %s255
        %s257 = sand.u32 %s164, 1
        %s258 = smul.addr %s257, 16
        %s259 = scalar_lea.vmem [#allocation2], %s258
        %p260 = scmp.lt.s32.totalorder %s20, 1
        %s261 = scalar_select %p260, %s20, 1
        %s262 = smul.addr %s261, 2
        %s263 = smul.addr %s262, 8
        %s264 = scalar_lea.vmem %s0, %s263
        %p265 = scmp.lt.s32.totalorder %s20, 1
        %s266 = scalar_select %p265, %s20, 1
        %s267 = smul.addr %s266, 2
        %s268 = smul.addr %s267, 4
        %s269 = scalar_lea.vmem %s1, %s268
        %v272 = vld [vmem:[%s269] sm:$0xf]
        %v273 = vld [vmem:[%s269 + $0x4] sm:$0xf]
        %v276 = vunpack.c.l.b16 %v272
        %v277 = vunpack.c.l.b16 %v273
        %v278 = vpack.c.b16 %v277, %v276
        %vm279 = vcmask 130048
        %v281 = vsel %vm279, %v278, 0
        %283 = vmatprep.subr.bf16.mxu0 0
        %284 = vmatpush1.bf16.msra.mxu0 1065369472
        %285 = vmatprep.subr.bf16.mxu0 0
        %286 = vmatpush1.bf16.msra.mxu0 0
        %287 = vmatprep.subr.bf16.mxu0 0
        %288 = vmatpush1.bf16.msra.mxu0 0
        %289 = vmatprep.subr.bf16.mxu0 0
        %290 = vmatpush1.bf16.msra.mxu0 0
        %291 = vmatprep.subr.bf16.mxu0 0
        %292 = vmatpush1.bf16.msra.mxu0 0
        %293 = vmatprep.subr.bf16.mxu0 0
        %294 = vmatpush1.bf16.msra.mxu0 0
        %295 = vmatprep.subr.bf16.mxu0 0
        %296 = vmatpush1.bf16.msra.mxu0 0
        %297 = vmatprep.subr.bf16.mxu0 0
        %298 = vmatpush1.bf16.msra.mxu0 0
        %299 = vmatprep.subr.bf16.mxu0 0
        %300 = vmatpush1.bf16.msra.mxu0 0
        %301 = vmatprep.subr.bf16.mxu0 0
        %302 = vmatpush1.bf16.msra.mxu0 0
        %303 = vmatprep.subr.bf16.mxu0 0
        %304 = vmatpush1.bf16.msra.mxu0 0
        %305 = vmatprep.subr.bf16.mxu0 0
        %306 = vmatpush1.bf16.msra.mxu0 0
        %307 = vmatprep.subr.bf16.mxu0 0
        %308 = vmatpush1.bf16.msra.mxu0 0
        %309 = vmatprep.subr.bf16.mxu0 0
        %310 = vmatpush1.bf16.msra.mxu0 0
        %311 = vmatprep.subr.bf16.mxu0 0
        %312 = vmatpush1.bf16.msra.mxu0 0
        %313 = vmatprep.subr.bf16.mxu0 0
        %314 = vmatpush1.bf16.msra.mxu0 0
        %315 = vmatprep.mubr.bf16.mxu0 0
        %316 = vmatmul.mubr.bf16.gmra.mrb[0].mxu0 %v281
        %v317 = vpop.f32.mrb[0].mxu0
        %v318 = vadd.f32 0.0, %v317
        %v319 = vpop.f32.mrb[0].mxu0
        %v320 = vpop.f32.mrb[0].mxu0
        %v321 = vadd.f32 0.0, %v320
        %v322 = vpop.f32.mrb[0].mxu0
        %323 = vdwg.mxu0
        %v324 = vmax.f32 %v318, 1.0
        %v325 = vmax.f32 %v321, 1.0
        %v326 = vrsqrt.pop %v324
        %v327 = vrsqrt.pop %v325
        %328 = vxpose.xlu0.b32.start [1/16] %v326, 128
        %329 = vxpose.xlu0.b32.cont [2/16] %v327, 128
        %330 = vxpose.xlu0.b32.cont [3/16] 0.0, 128
        %331 = vxpose.xlu0.b32.cont [4/16] 0.0, 128
        %332 = vxpose.xlu0.b32.cont [5/16] 0.0, 128
        %333 = vxpose.xlu0.b32.cont [6/16] 0.0, 128
        %334 = vxpose.xlu0.b32.cont [7/16] 0.0, 128
        %335 = vxpose.xlu0.b32.cont [8/16] 0.0, 128
        %336 = vxpose.xlu0.b32.cont [9/16] 0.0, 128
        %337 = vxpose.xlu0.b32.cont [10/16] 0.0, 128
        %338 = vxpose.xlu0.b32.cont [11/16] 0.0, 128
        %339 = vxpose.xlu0.b32.cont [12/16] 0.0, 128
        %340 = vxpose.xlu0.b32.cont [13/16] 0.0, 128
        %341 = vxpose.xlu0.b32.cont [14/16] 0.0, 128
        %342 = vxpose.xlu0.b32.cont [15/16] 0.0, 128
        %343 = vxpose.xlu0.b32.end [16/16] 0.0, 128
        %v344 = vpop.trf.xlu0
        %v345 = vpop.trf.xlu0
        %v346 = vpop.trf.xlu0
        %v347 = vpop.trf.xlu0
        %v348 = vpop.trf.xlu0
        %v349 = vpop.trf.xlu0
        %v350 = vpop.trf.xlu0
        %v351 = vpop.trf.xlu0
        %v352 = vpop.trf.xlu0
        %v353 = vpop.trf.xlu0
        %v354 = vpop.trf.xlu0
        %v355 = vpop.trf.xlu0
        %v356 = vpop.trf.xlu0
        %v357 = vpop.trf.xlu0
        %v358 = vpop.trf.xlu0
        %v359 = vpop.trf.xlu0
        %v360 = vunpack.c.l.bf16 %v272
        %v361 = vunpack.c.l.bf16 %v273
        %363 = vset.pattern.permute.xlu0 0
        %364 = vperm.xlu0 %363, %v326
        %v365 = vpop.permute.xlu0 %364
        %368 = vset.pattern.permute.xlu0 0
        %369 = vperm.xlu0 %368, %v327
        %v370 = vpop.permute.xlu0 %369
        %v372 = vmul.f32 %v365, %v360
        %v373 = vmul.f32 %v370, %v361
        %v374 = vlaneseq
        %v375 = vshrl.u32 %v374, 7
        %v376 = vsub.s32 0, %v375
        %v377 = vrot.slane %v344, %v376
        %v378 = vmul.f32 %v372, %v377
        %v379 = vmul.f32 %v373, %v377
        %v380 = vpack.c.bf16 %v379, %v378
        %v381 = vld [vmem:[%s264] sm:$0xff]
        %v382 = vld [vmem:[%s264 + $0x8] sm:$0xff]
        %v383 = vld [vmem:[%s2] sm:$0xff]
        %v384 = vld [vmem:[%s3] sm:$0x1]
        %v385 = vpack.c.bf16 %v382, %v381
        %v386 = vpack.c.bf16 %v383, %v383
        %vm387 = vcmask 64512
        %v389 = vsel %vm387, %v385, 0
        %vm391 = vcmask 1043456
        %v393 = vsel %vm391, %v386, 0
        %395 = vmatprep.subr.bf16.mxu0 0
        %396 = vmatpush1.bf16.msra.mxu0 %v393
        %397 = vmatprep.subr.bf16.mxu0 0
        %398 = vmatpush1.bf16.msra.mxu0 0
        %399 = vmatprep.subr.bf16.mxu0 0
        %400 = vmatpush1.bf16.msra.mxu0 0
        %401 = vmatprep.subr.bf16.mxu0 0
        %402 = vmatpush1.bf16.msra.mxu0 0
        %403 = vmatprep.subr.bf16.mxu0 0
        %404 = vmatpush1.bf16.msra.mxu0 0
        %405 = vmatprep.subr.bf16.mxu0 0
        %406 = vmatpush1.bf16.msra.mxu0 0
        %407 = vmatprep.subr.bf16.mxu0 0
        %408 = vmatpush1.bf16.msra.mxu0 0
        %409 = vmatprep.subr.bf16.mxu0 0
        %410 = vmatpush1.bf16.msra.mxu0 0
        %411 = vmatprep.subr.bf16.mxu0 0
        %412 = vmatpush1.bf16.msra.mxu0 0
        %413 = vmatprep.subr.bf16.mxu0 0
        %414 = vmatpush1.bf16.msra.mxu0 0
        %415 = vmatprep.subr.bf16.mxu0 0
        %416 = vmatpush1.bf16.msra.mxu0 0
        %417 = vmatprep.subr.bf16.mxu0 0
        %418 = vmatpush1.bf16.msra.mxu0 0
        %419 = vmatprep.subr.bf16.mxu0 0
        %420 = vmatpush1.bf16.msra.mxu0 0
        %421 = vmatprep.subr.bf16.mxu0 0
        %422 = vmatpush1.bf16.msra.mxu0 0
        %423 = vmatprep.subr.bf16.mxu0 0
        %424 = vmatpush1.bf16.msra.mxu0 0
        %425 = vmatprep.subr.bf16.mxu0 0
        %426 = vmatpush1.bf16.msra.mxu0 0
        %427 = vmatprep.mubr.bf16.mxu0 0
        %428 = vmatmul.mubr.bf16.gmra.mrb[0].mxu0 %v389
        %v429 = vpop.f32.mrb[0].mxu0
        %v430 = vadd.f32 0.0, %v429
        %v431 = vpop.f32.mrb[0].mxu0
        %v432 = vpop.f32.mrb[0].mxu0
        %v433 = vadd.f32 0.0, %v432
        %v434 = vpop.f32.mrb[0].mxu0
        %435 = vdwg.mxu0
        %v436 = vpack.c.bf16 %v433, %v430
        %v438 = vlaneseq
        %v439 = vshrl.u32 %v438, 7
        %v440 = vsub.s32 0, %v439
        %v441 = vrot.slane %v384, %v440
        %v444 = vsel %vm279, %v380, 0
        %446 = vmatprep.subr.bf16.mxu0 0
        %447 = vmatpush1.bf16.msra.mxu0 %v436
        %448 = vmatprep.subr.bf16.mxu0 0
        %449 = vmatpush1.bf16.msra.mxu0 0
        %450 = vmatprep.subr.bf16.mxu0 0
        %451 = vmatpush1.bf16.msra.mxu0 0
        %452 = vmatprep.subr.bf16.mxu0 0
        %453 = vmatpush1.bf16.msra.mxu0 0
        %454 = vmatprep.subr.bf16.mxu0 0
        %455 = vmatpush1.bf16.msra.mxu0 0
        %456 = vmatprep.subr.bf16.mxu0 0
        %457 = vmatpush1.bf16.msra.mxu0 0
        %458 = vmatprep.subr.bf16.mxu0 0
        %459 = vmatpush1.bf16.msra.mxu0 0
        %460 = vmatprep.subr.bf16.mxu0 0
        %461 = vmatpush1.bf16.msra.mxu0 0
        %462 = vmatprep.subr.bf16.mxu0 0
        %463 = vmatpush1.bf16.msra.mxu0 0
        %464 = vmatprep.subr.bf16.mxu0 0
        %465 = vmatpush1.bf16.msra.mxu0 0
        %466 = vmatprep.subr.bf16.mxu0 0
        %467 = vmatpush1.bf16.msra.mxu0 0
        %468 = vmatprep.subr.bf16.mxu0 0
        %469 = vmatpush1.bf16.msra.mxu0 0
        %470 = vmatprep.subr.bf16.mxu0 0
        %471 = vmatpush1.bf16.msra.mxu0 0
        %472 = vmatprep.subr.bf16.mxu0 0
        %473 = vmatpush1.bf16.msra.mxu0 0
        %474 = vmatprep.subr.bf16.mxu0 0
        %475 = vmatpush1.bf16.msra.mxu0 0
        %476 = vmatprep.subr.bf16.mxu0 0
        %477 = vmatpush1.bf16.msra.mxu0 0
        %478 = vmatprep.mubr.bf16.mxu0 0
        %479 = vmatmul.mubr.bf16.gmra.mrb[0].mxu0 %v444
        %v480 = vpop.f32.mrb[0].mxu0
        %v481 = vadd.f32 %v441, %v480
        %v482 = vpop.f32.mrb[0].mxu0
        %v483 = vpop.f32.mrb[0].mxu0
        %v484 = vadd.f32 %v441, %v483
        %v485 = vpop.f32.mrb[0].mxu0
        %486 = vdwg.mxu0
        %v487 = vmax.f32 %v481, 0.0
        %v488 = vmax.f32 %v484, 0.0
        %v489 = vld [vmem:[%s4] sm:$0xff]
        %v490 = vld [vmem:[%s4 + $0x8] sm:$0xff]
        %v491 = vld [vmem:[%s4 + $0x10] sm:$0xff]
        %v492 = vld [vmem:[%s4 + $0x18] sm:$0xff]
        %v493 = vld [vmem:[%s5] sm:$0x1]
        %v494 = vpack.c.bf16 %v488, %v487
        %v495 = vpack.c.bf16 %v490, %v489
        %v496 = vpack.c.bf16 %v492, %v491
        %vm497 = vcmask 261120
        %v499 = vsel %vm497, %v494, 0
        %501 = vmatprep.subr.bf16.mxu0 0
        %502 = vmatpush1.bf16.msra.mxu0 %v495
        %503 = vmatprep.subr.bf16.mxu0 0
        %504 = vmatpush1.bf16.msra.mxu0 %v496
        %505 = vmatprep.subr.bf16.mxu0 0
        %506 = vmatpush1.bf16.msra.mxu0 0
        %507 = vmatprep.subr.bf16.mxu0 0
        %508 = vmatpush1.bf16.msra.mxu0 0
        %509 = vmatprep.subr.bf16.mxu0 0
        %510 = vmatpush1.bf16.msra.mxu0 0
        %511 = vmatprep.subr.bf16.mxu0 0
        %512 = vmatpush1.bf16.msra.mxu0 0
        %513 = vmatprep.subr.bf16.mxu0 0
        %514 = vmatpush1.bf16.msra.mxu0 0
        %515 = vmatprep.subr.bf16.mxu0 0
        %516 = vmatpush1.bf16.msra.mxu0 0
        %517 = vmatprep.subr.bf16.mxu0 0
        %518 = vmatpush1.bf16.msra.mxu0 0
        %519 = vmatprep.subr.bf16.mxu0 0
        %520 = vmatpush1.bf16.msra.mxu0 0
        %521 = vmatprep.subr.bf16.mxu0 0
        %522 = vmatpush1.bf16.msra.mxu0 0
        %523 = vmatprep.subr.bf16.mxu0 0
        %524 = vmatpush1.bf16.msra.mxu0 0
        %525 = vmatprep.subr.bf16.mxu0 0
        %526 = vmatpush1.bf16.msra.mxu0 0
        %527 = vmatprep.subr.bf16.mxu0 0
        %528 = vmatpush1.bf16.msra.mxu0 0
        %529 = vmatprep.subr.bf16.mxu0 0
        %530 = vmatpush1.bf16.msra.mxu0 0
        %531 = vmatprep.subr.bf16.mxu0 0
        %532 = vmatpush1.bf16.msra.mxu0 0
        %533 = vmatprep.mubr.bf16.mxu0 0
        %534 = vmatmul.mubr.bf16.gmra.mrb[0].mxu0 %v499
        %v535 = vpop.f32.mrb[0].mxu0
        %v536 = vadd.f32 0.0, %v535
        %v537 = vpop.f32.mrb[0].mxu0
        %v538 = vpop.f32.mrb[0].mxu0
        %v539 = vadd.f32 0.0, %v538
        %v540 = vpop.f32.mrb[0].mxu0
        %541 = vdwg.mxu0
        %v542 = vpack.c.bf16 %v539, %v536
        %v544 = vlaneseq
        %v545 = vshrl.u32 %v544, 7
        %v546 = vsub.s32 0, %v545
        %v547 = vrot.slane %v493, %v546
        %549 = vmatprep.subr.bf16.mxu0 0
        %550 = vmatpush1.bf16.msra.mxu0 %v542
        %551 = vmatprep.subr.bf16.mxu0 0
        %552 = vmatpush1.bf16.msra.mxu0 0
        %553 = vmatprep.subr.bf16.mxu0 0
        %554 = vmatpush1.bf16.msra.mxu0 0
        %555 = vmatprep.subr.bf16.mxu0 0
        %556 = vmatpush1.bf16.msra.mxu0 0
        %557 = vmatprep.subr.bf16.mxu0 0
        %558 = vmatpush1.bf16.msra.mxu0 0
        %559 = vmatprep.subr.bf16.mxu0 0
        %560 = vmatpush1.bf16.msra.mxu0 0
        %561 = vmatprep.subr.bf16.mxu0 0
        %562 = vmatpush1.bf16.msra.mxu0 0
        %563 = vmatprep.subr.bf16.mxu0 0
        %564 = vmatpush1.bf16.msra.mxu0 0
        %565 = vmatprep.subr.bf16.mxu0 0
        %566 = vmatpush1.bf16.msra.mxu0 0
        %567 = vmatprep.subr.bf16.mxu0 0
        %568 = vmatpush1.bf16.msra.mxu0 0
        %569 = vmatprep.subr.bf16.mxu0 0
        %570 = vmatpush1.bf16.msra.mxu0 0
        %571 = vmatprep.subr.bf16.mxu0 0
        %572 = vmatpush1.bf16.msra.mxu0 0
        %573 = vmatprep.subr.bf16.mxu0 0
        %574 = vmatpush1.bf16.msra.mxu0 0
        %575 = vmatprep.subr.bf16.mxu0 0
        %576 = vmatpush1.bf16.msra.mxu0 0
        %577 = vmatprep.subr.bf16.mxu0 0
        %578 = vmatpush1.bf16.msra.mxu0 0
        %579 = vmatprep.subr.bf16.mxu0 0
        %580 = vmatpush1.bf16.msra.mxu0 0
        %581 = vmatprep.mubr.bf16.mxu0 0
        %582 = vmatmul.mubr.bf16.gmra.mrb[0].mxu0 %v444
        %v583 = vpop.f32.mrb[0].mxu0
        %v584 = vadd.f32 %v547, %v583
        %v585 = vpop.f32.mrb[0].mxu0
        %v586 = vpop.f32.mrb[0].mxu0
        %v587 = vadd.f32 %v547, %v586
        %v588 = vpop.f32.mrb[0].mxu0
        %589 = vdwg.mxu0
        %592 = vrot.lane.b32.xlu0 %v584, 32
        %v593 = vpop.permute.xlu0 %592
        %594 = vrot.lane.b32.xlu0 %v587, 32
        %v595 = vpop.permute.xlu0 %594
        %v598 = vsel %vm497, %v487, %v593
        %v599 = vsel %vm497, %v488, %v595
        %vm600 = vcmask 392192
        %v601 = vsel %vm600, %v598, 0.0
        %v602 = vsel %vm600, %v599, 0.0
        %603 = vst [vmem:[%s259] sm:$0xff] %v601
        %604 = vst [vmem:[%s259 + $0x8] sm:$0xff] %v602
        %s605 = sand.u32 %s164, 1
        %s606 = scalar_lea.sflag [#allocation3], %s605
        %s607 = sand.u32 %s164, 1
        %s608 = smul.addr %s607, 16
        %s609 = scalar_lea.vmem [#allocation2], %s608
        // Predicated region
        $region45: #{tpu_custom_call.1} parent=43 // pred_check
          %p610 = pneg %p174
        $region46: #{tpu_custom_call.1} parent=43 // pred_check_branch
          %612 = sbr.rel (%p610) target = $region48
        $region47: #{tpu_custom_call.1} parent=43 // pred_region
          %s614 = ssub.s32 256, 256
          %615 = vsyncadd %s606, %s614
          %s616 = smul.addr %s20, 2
          %s617 = smul.addr %s616, 128
          %s618 = scalar_lea.hbm %s6, %s617
          %s619 = sshll.u32 %s609, 4
          %s620 = int_to_ptr.vmem [resolvable:$true] %s619
          %625 = dma.vmem_to_hbm [thread:$0]  %s620, 256, %s618, %s606, 128, 128, 8
        $region48: #{tpu_custom_call.1} parent=43 // pred_fallthru
          _
      $region44: #{tpu_custom_call.1} parent=5 // pred_fallthru
        _
      %p626 = scmp.le.s32.totalorder 2, %s15
      // Predicated region
      $region49: #{tpu_custom_call.1} parent=5 // pred_check
        %p627 = pneg %p626
      $region50: #{tpu_custom_call.1} parent=5 // pred_check_branch
        %629 = sbr.rel (%p627) target = $region52
      $region51: #{tpu_custom_call.1} parent=5 // pred_region
        %s630 = ssub.s32 %s15, 2
        // Predicated region
        $region53: #{tpu_custom_call.1} parent=51 // pred_check
          %p631 = pneg %p180
        $region54: #{tpu_custom_call.1} parent=51 // pred_check_branch
          %633 = sbr.rel (%p631) target = $region56
        $region55: #{tpu_custom_call.1} parent=51 // pred_region
          %s634 = sand.u32 %s165, 1
          %s635 = scalar_lea.sflag [#allocation3], %s634
          %s636 = sand.u32 %s165, 1
          %s637 = smul.addr %s636, 16
          %s638 = scalar_lea.vmem [#allocation2], %s637
          %639 = dma.done %s635, 256
        $region56: #{tpu_custom_call.1} parent=51 // pred_fallthru
          _
      $region52: #{tpu_custom_call.1} parent=5 // pred_fallthru
        _
    $region6: #{tpu_custom_call.1} parent=1 // loop_footer
      %s19 = sadd.s32 1, %s15
    $region7: #{tpu_custom_call.1} parent=1 // loop_footer_branch
      %14 = sbr.rel target = $region3
    $region8: #{tpu_custom_call.1} parent=1 // loop_exit
      _
    %640 = vsyncpa [#allocation3], 1
    %s641 = scalar_lea.sflag [#allocation3], 1
    %642 = vsyncpa %s641, 1

</llo_original>
